<compile_context>
chip_gen: v5e
topology: v5e:2x2
jax: 0.10.0
libtpu: 0.0.40
codegen_flags: <defaults>
</compile_context>

<pallas_src>
import jax
import jax.numpy as jnp
from jax.experimental import pallas as pl
from jax.experimental.pallas import tpu as pltpu

# Conservative per-call VMEM budget for tile sizing (fits every generation,
# including v7x's 64 MiB physical VMEM, with headroom for Mosaic scratch).
_VMEM_TILE_BUDGET = 40 << 20


def linear_softmax_kernel(x_ref, w_ref, b_ref, o_ref):
    # logits = x @ W_t + b ; W_t is the init-time transposed weight (D, O_pad),
    # so this is a plain contraction the MXU handles directly (f32 accumulation).
    logits = jnp.dot(x_ref[...], w_ref[...], preferred_element_type=jnp.float32)
    logits = logits + b_ref[...]                      # (1, O_pad) broadcasts over rows
    # Numerically-stable softmax over the last (lane) dim; whole class dim is in-block.
    m = jnp.max(logits, axis=-1, keepdims=True)
    e = jnp.exp(logits - m)
    denom = jnp.sum(e, axis=-1, keepdims=True)
    # Exact divide on the (tm, 1) column -> rows sum to 1 to f32 precision.
    o_ref[...] = (e * (1.0 / denom)).astype(o_ref.dtype)


def _choose_opad(out_dim):
    """Lane-dense padding only when the extra output-write traffic is modest."""
    pad_to = ((out_dim + 127) // 128) * 128
    if pad_to == out_dim:
        return out_dim
    if pad_to - out_dim <= max(32, out_dim // 4):     # "near a multiple of 128"
        return pad_to
    return out_dim                                    # tiny O: keep unpadded (masked store)


def prepare_linear_net_params(weight, bias, *, compute_dtype=jnp.bfloat16):
    """One-time (init-level) prep: transpose W to (D, O_pad), pad if worthwhile, cast.

    weight: (O, D) float32 (PyTorch nn.Linear layout), bias: (O,) float32.
    Returns (w_t, b_row, out_dim) to be passed to linear_net_forward.
    """
    O, D = weight.shape
    O_pad = _choose_opad(O)
    w_t = weight.T                                    # (D, O) — one-time copy at init
    b_f32 = bias.astype(jnp.float32)
    if O_pad != O:
        # Padded classes: zero weight columns + very negative (f32) bias -> softmax ~0.
        w_t = jnp.pad(w_t, ((0, 0), (0, O_pad - O)))
        b_f32 = jnp.concatenate(
            [b_f32, jnp.full((O_pad - O,), -1e30, dtype=jnp.float32)])
    return w_t.astype(compute_dtype), b_f32.reshape(1, O_pad), O


def linear_net_forward(x, w_t, b_row, out_dim, *, tm=None):
    """x: (B, D) f32. w_t: (D, O_pad) prepared weight. b_row: (1, O_pad) f32."""
    B, D = x.shape
    Dw, O_pad = w_t.shape
    assert Dw == D

    in_dtype = w_t.dtype
    # In a full model this cast fuses into the producer of x; keeping it in the
    # wrapper halves the kernel's HBM read traffic for x when in_dtype is bf16.
    x_c = x.astype(in_dtype)

    in_bytes = jnp.dtype(in_dtype).itemsize
    w_bytes = D * O_pad * in_bytes
    b_bytes = O_pad * 4

    if tm is None:
        # Budget: resident weight/bias + double-buffered x tile + double-buffered out tile.
        per_row = 2 * D * in_bytes + 2 * O_pad * 4
        avail = max(_VMEM_TILE_BUDGET - w_bytes - b_bytes, 512 * 1024)
        tm = int(min(1024, max(16, avail // per_row)))
        tm = max(16, (tm // 16) * 16)                 # bf16 sublane tile is (16, 128)
    if tm >= B:
        tm = B                                        # full-dim block: always legal
    else:
        tm = max(8, (tm // 8) * 8)                    # ragged edge block handled by Pallas

    grid = (pl.cdiv(B, tm),)

    vmem_need = w_bytes + b_bytes + 2 * tm * D * in_bytes + 2 * tm * O_pad * 4
    vmem_limit = int(min(64 << 20, max(32 << 20, vmem_need + (2 << 20))))

    out = pl.pallas_call(
        linear_softmax_kernel,
        out_shape=jax.ShapeDtypeStruct((B, O_pad), jnp.float32),
        grid_spec=pl.GridSpec(
            grid=grid,
            in_specs=[
                pl.BlockSpec((tm, D), lambda i: (i, 0)),      # x: streamed per batch tile
                pl.BlockSpec((D, O_pad), lambda i: (0, 0)),   # weight: VMEM-resident
                pl.BlockSpec((1, O_pad), lambda i: (0, 0)),   # bias: VMEM-resident
            ],
            out_specs=pl.BlockSpec((tm, O_pad), lambda i: (i, 0)),
        ),
        compiler_params=pltpu.CompilerParams(
            dimension_semantics=("parallel",),
            vmem_limit_bytes=vmem_limit,
        ),
    )(x_c, w_t, b_row)

    return out if O_pad == out_dim else out[:, :out_dim]


if __name__ == "__main__":
    # Small shapes consistent with Linear_net(input_dim, out_dim)
    batch, input_dim, out_dim = 8, 32, 16

    key = jax.random.PRNGKey(0)
    kx, kw, kb = jax.random.split(key, 3)

    x = jax.random.normal(kx, (batch, input_dim), dtype=jnp.float32)
    # torch.nn.init.normal_(weight): standard normal init
    weight = jax.random.normal(kw, (out_dim, input_dim), dtype=jnp.float32)
    # nn.Linear default bias init: uniform(-1/sqrt(fan_in), 1/sqrt(fan_in))
    bound = 1.0 / (input_dim ** 0.5)
    bias = jax.random.uniform(kb, (out_dim,), dtype=jnp.float32,
                              minval=-bound, maxval=bound)

    ref_f32 = jax.nn.softmax(x @ weight.T + bias, axis=-1)

    # --- f32 path: matches the PyTorch module semantics ---
    w32, b32, o32 = prepare_linear_net_params(weight, bias, compute_dtype=jnp.float32)
    out_f32 = linear_net_forward(x, w32, b32, o32)
    jax.block_until_ready(out_f32)
    assert out_f32.shape == (batch, out_dim)
    assert jnp.allclose(out_f32, ref_f32, atol=2e-3, rtol=2e-3)
    assert jnp.allclose(jnp.sum(out_f32, axis=-1), 1.0, atol=1e-4)

    # --- bf16-operand path (perf default): f32 accumulation + f32 softmax ---
    wbf, bbf, obf = prepare_linear_net_params(weight, bias, compute_dtype=jnp.bfloat16)
    out_bf = linear_net_forward(x, wbf, bbf, obf)
    jax.block_until_ready(out_bf)
    ref_bf = jax.nn.softmax(
        jnp.dot(x.astype(jnp.bfloat16), weight.astype(jnp.bfloat16).T,
                preferred_element_type=jnp.float32) + bias, axis=-1)
    assert out_bf.shape == (batch, out_dim)
    assert jnp.allclose(out_bf, ref_bf, atol=2e-3, rtol=2e-3)
    assert jnp.allclose(out_bf, ref_f32, atol=1e-1)   # loose sanity vs f32 math
    assert jnp.allclose(jnp.sum(out_bf, axis=-1), 1.0, atol=1e-4)

    print("KERNEL_OK")
</pallas_src>

<mosaic_0001>
module attributes {stable_mosaic.version = 11 : i64} {
  func.func @linear_softmax_kernel(%arg0: i32, %arg1: memref<8x32xf32, #tpu.memory_space<vmem>>, %arg2: memref<32x16xf32, #tpu.memory_space<vmem>>, %arg3: memref<1x16xf32, #tpu.memory_space<vmem>>, %arg4: memref<8x16xf32, #tpu.memory_space<vmem>>) attributes {dimension_semantics = [#tpu.dimension_semantics<parallel>], iteration_bounds = array<i64: 1>, scalar_prefetch = 0 : i64, scratch_operands = 0 : i64, tpu.core_type = #tpu.core_type<tc>, window_params = [{transform_indices = @transform_0, window_bounds = array<i64: 8, 32>}, {pipeline_mode = #tpu.pipeline_mode<synchronous>, transform_indices = @transform_1, window_bounds = array<i64: 32, 16>}, {pipeline_mode = #tpu.pipeline_mode<synchronous>, transform_indices = @transform_2, window_bounds = array<i64: 1, 16>}, {transform_indices = @transform_3, window_bounds = array<i64: 8, 16>}]} {
    %c0 = arith.constant 0 : index
    %c0_0 = arith.constant 0 : index
    %0 = vector.load %arg1[%c0, %c0_0] : memref<8x32xf32, #tpu.memory_space<vmem>>, vector<8x32xf32>
    %c0_1 = arith.constant 0 : index
    %c0_2 = arith.constant 0 : index
    %1 = vector.load %arg2[%c0_1, %c0_2] : memref<32x16xf32, #tpu.memory_space<vmem>>, vector<32x16xf32>
    %cst = arith.constant dense<0.000000e+00> : vector<8x16xf32>
    %2 = tpu.matmul %0, %1, %cst {dimension_numbers = #tpu.dot_dimension_numbers<[1], [0], [0], [1], [0, 0, 1, 1], [], []>} : vector<8x32xf32>, vector<32x16xf32>, vector<8x16xf32> -> vector<8x16xf32>
    %c0_3 = arith.constant 0 : index
    %c0_4 = arith.constant 0 : index
    %3 = vector.load %arg3[%c0_3, %c0_4] : memref<1x16xf32, #tpu.memory_space<vmem>>, vector<1x16xf32>
    %4 = vector.broadcast %3 : vector<1x16xf32> to vector<8x16xf32>
    %5 = arith.addf %2, %4 : vector<8x16xf32>
    %cst_5 = arith.constant dense<0xFF800000> : vector<8xf32>
    %6 = vector.multi_reduction <maximumf>, %5, %cst_5 [1] : vector<8x16xf32> to vector<8xf32>
    %7 = vector.shape_cast %6 : vector<8xf32> to vector<8x1xf32>
    %8 = vector.broadcast %7 : vector<8x1xf32> to vector<8x16xf32>
    %9 = arith.subf %5, %8 : vector<8x16xf32>
    %10 = math.exp %9 : vector<8x16xf32>
    %cst_6 = arith.constant dense<0.000000e+00> : vector<8xf32>
    %11 = vector.multi_reduction <add>, %10, %cst_6 [1] : vector<8x16xf32> to vector<8xf32>
    %12 = vector.shape_cast %11 : vector<8xf32> to vector<8x1xf32>
    %cst_7 = arith.constant 1.000000e+00 : f32
    %13 = vector.broadcast %cst_7 : f32 to vector<8x1xf32>
    %14 = arith.divf %13, %12 : vector<8x1xf32>
    %15 = vector.broadcast %14 : vector<8x1xf32> to vector<8x16xf32>
    %16 = arith.mulf %10, %15 : vector<8x16xf32>
    %c0_8 = arith.constant 0 : index
    %c0_9 = arith.constant 0 : index
    %17 = vector.load %arg4[%c0_8, %c0_9] : memref<8x16xf32, #tpu.memory_space<vmem>>, vector<8x16xf32>
    tpu.vector_store %arg4[%c0_8, %c0_9], %16 {strides = array<i32>} : memref<8x16xf32, #tpu.memory_space<vmem>>, vector<8x16xf32>,
    return
  }
  func.func @transform_0(%arg0: i32) -> (i32, i32) {
    %c0_i32 = arith.constant 0 : i32
    %c0_i32_0 = arith.constant 0 : i32
    return %arg0, %c0_i32 : i32, i32
  }
  func.func @transform_1(%arg0: i32) -> (i32, i32) {
    %c0_i32 = arith.constant 0 : i32
    %c0_i32_0 = arith.constant 0 : i32
    %c0_i32_1 = arith.constant 0 : i32
    return %c0_i32, %c0_i32_0 : i32, i32
  }
  func.func @transform_2(%arg0: i32) -> (i32, i32) {
    %c0_i32 = arith.constant 0 : i32
    %c0_i32_0 = arith.constant 0 : i32
    %c0_i32_1 = arith.constant 0 : i32
    return %c0_i32, %c0_i32_0 : i32, i32
  }
  func.func @transform_3(%arg0: i32) -> (i32, i32) {
    %c0_i32 = arith.constant 0 : i32
    %c0_i32_0 = arith.constant 0 : i32
    return %arg0, %c0_i32 : i32, i32
  }
}

</mosaic_0001>

<llo_original>
// kernel: tpu_custom_call.1
$region0: #{tpu_custom_call.1}
  #allocation0 [shape = 'u32[]', space=smem, size = 0x4, offset = 0x4, fixed_abs, tag = 'smem constant byte address 0x4 - core index']
  #allocation1 [shape = 'u32[72,128]{1,0:T(1,128)}', space=vmem, size = 0x9000, scoped, tag = 'internal scratch']
  %s0 = inlined_call_operand.vmem [shape: f32[8,32], index: 0, kind: input, shape index: {}]
  %s1 = inlined_call_operand.vmem [shape: f32[32,16], index: 1, kind: input, shape index: {}]
  %s2 = inlined_call_operand.vmem [shape: f32[1,16], index: 2, kind: input, shape index: {}]
  %s3 = inlined_call_operand.hbm [shape: f32[8,16], index: 3, kind: output, shape index: {}]
  %s4 = sld [smem:[#allocation0]]
  $region22: #{tpu_custom_call.1} parent=0
    _
  %s6 = ssub.s32 1, %s4
  %s7 = scalar_select 0, %s6, %s4
  $region1: #{tpu_custom_call.1} parent=0
    #allocation2 [shape = 'u8[4096]{0}', space=vmem, size = 0x1000, scoped, tag = 'output window, operand 0, single buffered']
    #allocation3 [shape = 's32[1]{0}', space=sflag, size = 0x4, scoped, tag = 'scoped memory for tpu_custom_call.1']
    %8 = vsyncpa [#allocation3], 0
    // Predicated region
    $region2: #{tpu_custom_call.1} parent=1 // pred_check
      _
    $region3: #{tpu_custom_call.1} parent=1 // pred_check_branch
      %10 = sbr.rel (0) target = $region5
    $region4: #{tpu_custom_call.1} parent=1 // pred_region
      _
    $region5: #{tpu_custom_call.1} parent=1 // pred_fallthru
      _
    // Predicated region
    $region6: #{tpu_custom_call.1} parent=1 // pred_check
      _
    $region7: #{tpu_custom_call.1} parent=1 // pred_check_branch
      %12 = sbr.rel (0) target = $region9
    $region8: #{tpu_custom_call.1} parent=1 // pred_region
      _
    $region9: #{tpu_custom_call.1} parent=1 // pred_fallthru
      _
    // Predicated region
    $region10: #{tpu_custom_call.1} parent=1 // pred_check
      _
    $region11: #{tpu_custom_call.1} parent=1 // pred_check_branch
      %14 = sbr.rel (0) target = $region13
    $region12: #{tpu_custom_call.1} parent=1 // pred_region
      _
    $region13: #{tpu_custom_call.1} parent=1 // pred_fallthru
      _
    %v15 = vld [vmem:[%s0] sm:$0xff]
    %v16 = vld [vmem:[%s1] sm:$0xff]
    %v17 = vld [vmem:[%s1 + $0x8] sm:$0xff]
    %v18 = vld [vmem:[%s1 + $0x10] sm:$0xff]
    %v19 = vld [vmem:[%s1 + $0x18] sm:$0xff]
    %v20 = vld [vmem:[%s2] sm:$0x1]
    %v22 = vperm.slane %v20, 0
    %vm24 = vcmask 261120
    %v26 = vsel %vm24, %v15, 0
    %28 = vmatpush.msra.mxu0 0.0
    %29 = vmatpush.msra.mxu0 0.0
    %30 = vmatpush.msra.mxu0 0.0
    %31 = vmatpush.msra.mxu0 0.0
    %32 = vmatpush.msra.mxu0 0.0
    %33 = vmatpush.msra.mxu0 0.0
    %34 = vmatpush.msra.mxu0 0.0
    %35 = vmatpush.msra.mxu0 0.0
    %36 = vmatpush.msra.mxu0 0.0
    %37 = vmatpush.msra.mxu0 0.0
    %38 = vmatpush.msra.mxu0 0.0
    %39 = vmatpush.msra.mxu0 0.0
    %40 = vmatpush.msra.mxu0 %v19
    %41 = vmatpush.msra.mxu0 %v18
    %42 = vmatpush.msra.mxu0 %v17
    %43 = vmatpush.msra.mxu0 %v16
    %44 = vmatmul.f32.gmra.mxu0 %v26
    %v45 = vpop.f32.mrf.mxu0
    %v46 = vadd.f32 %v22, %v45
    %47 = vdwg.mxu0
    %vm48 = vcmask 130048
    %v49 = vsel %vm48, %v46, -inf
    %50 = vmax.xlane.f32.xlu0 %v49
    %v51 = vpop.xlane.xlu0 %50
    %v52 = vsub.f32 %v46, %v51
    %v53 = vmul.f32 %v52, 1.442695
    %v54 = vpow.pop %v53
    %v55 = vsel %vm48, %v54, 0.0
    %56 = vadd.xlane.f32.xlu0 %v55
    %v57 = vpop.xlane.xlu0 %56
    %v58 = vrcp.pop %v57
    %v59 = vmul.f32 %v57, %v58
    %v60 = vsub.f32 1.0, %v59
    %v61 = vmul.f32 %v58, %v60
    %v62 = vadd.f32 %v58, %v61
    %vm63 = vweird.f32 %v57
    %vm64 = vweird.f32 %v58
    %vm65 = vmor %vm63, %vm64
    %v66 = vsel %vm65, %v58, %v62
    %v67 = vand.u32 2147483647, %v57
    %vm68 = vcmp.eq.f32.partialorder %v67, 8.507059e+37
    %v69 = vand.u32 %v57, 2147483648
    %v70 = vor.u32 1.1754944e-38, %v69
    %v71 = vsel %vm68, %v70, %v66
    %v72 = vmul.f32 1.0, %v71
    %v73 = vmul.f32 %v54, %v72
    %74 = vst.msk [vmem:[#allocation2] sm:$0xff] %vm48, %v73
    // Predicated region
    $region14: #{tpu_custom_call.1} parent=1 // pred_check
      _
    $region15: #{tpu_custom_call.1} parent=1 // pred_check_branch
      %76 = sbr.rel (0) target = $region17
    $region16: #{tpu_custom_call.1} parent=1 // pred_region
      %78 = vsyncadd [#allocation3], 0
      %s80 = sshll.u32 [#allocation2], 4
      %s81 = int_to_ptr.vmem [resolvable:$true] %s80
      %s82 = sshll.u32 %s3, 4
      %s83 = int_to_ptr.hbm [resolvable:$true] %s82
      %85 = dma.vmem_to_hbm [thread:$0]  %s81, 128, %s83, [#allocation3]
    $region17: #{tpu_custom_call.1} parent=1 // pred_fallthru
      _
    // Predicated region
    $region18: #{tpu_custom_call.1} parent=1 // pred_check
      _
    $region19: #{tpu_custom_call.1} parent=1 // pred_check_branch
      %87 = sbr.rel (0) target = $region21
    $region20: #{tpu_custom_call.1} parent=1 // pred_region
      %89 = dma.done [#allocation3], 128
    $region21: #{tpu_custom_call.1} parent=1 // pred_fallthru
      _
    %90 = vsyncpa [#allocation3], 1

</llo_original>
